<compile_context>
chip_gen: v7x
topology: tpu7x:2x2x1
jax: 0.10.0
libtpu: 0.0.40
codegen_flags: <defaults>
</compile_context>

<pallas_src>
import functools

import jax
import jax.numpy as jnp
from jax.experimental import pallas as pl
from jax.experimental.pallas import tpu as pltpu


def _round_up(x, m):
    return ((x + m - 1) // m) * m


def _pick_tb(batch, cap=1024):
    """Batch tile: multiple of 8 (sublane), capped at `cap`.

    Aims for >=2 grid steps when the batch is big enough so both v7x
    TensorCores get work; harmless (+~0.35us) on 1-TC v5e/v6e.  VMEM is not
    the limiter at these sizes (see header comment), so bigger is better up
    to the cap.
    """
    if batch <= 8:
        return 8
    half = _round_up(-(-batch // 2), 8)           # ceil(B/2), sublane-aligned
    return max(8, min(cap, half, _round_up(batch, 8)))


def critic_kernel(state_ref, action_ref,
                  w1s_ref, w1a_ref, w2_ref, w3_ref, w4_ref, wq_ref,
                  b_ref,
                  q_ref,
                  *, dims, acc_cast):
    """One batch-tile of the critic forward.

    b_ref is a packed (5, Dmax) f32 bias buffer: row i holds bias of layer i,
    zero-padded on the lane axis.  wq_ref is the final weight as a (1, F4)
    row vector so the last layer runs on the VPU/XLU, not the MXU.  `acc_cast`
    is the MXU operand dtype (== weight dtype); activations are cast to it
    right before each dot, everything elementwise stays f32 (v5e-safe bf16).
    """
    f1, f2, f3, f4 = dims
    cast = lambda v: v.astype(acc_cast)

    b = b_ref[...]                                # (5, Dmax), f32
    b1 = b[0:1, :f1]
    b2 = b[1:2, :f2]
    b3 = b[2:3, :f3]
    b4 = b[3:4, :f4]
    bq = b[4:5, 0:1]

    s = state_ref[...]
    a = action_ref[...]

    # fc1 on the fused (state | action) input: two MXU matmuls, shared bias.
    h = (jnp.dot(cast(s), w1s_ref[...], preferred_element_type=jnp.float32)
         + jnp.dot(cast(a), w1a_ref[...], preferred_element_type=jnp.float32)
         + b1)
    h = jnp.maximum(h, 0.0)

    h = jnp.dot(cast(h), w2_ref[...], preferred_element_type=jnp.float32) + b2
    h = jnp.maximum(h, 0.0)

    h = jnp.dot(cast(h), w3_ref[...], preferred_element_type=jnp.float32) + b3
    h = jnp.maximum(h, 0.0)

    h = jnp.dot(cast(h), w4_ref[...], preferred_element_type=jnp.float32) + b4
    h = jnp.maximum(h, 0.0)

    # Final (F4 -> 1) layer: VPU multiply + XLU lane reduction instead of an
    # N=1 MXU matmul.  Stored lane-dense as a (1, 1, TB) row.
    wq = wq_ref[...].astype(jnp.float32)          # (1, F4)
    q = jnp.sum(h * wq, axis=-1, keepdims=True) + bq      # (TB, 1)
    q_ref[...] = q.reshape(1, 1, -1).astype(q_ref.dtype)  # relayout -> lanes


def critic_forward(state, action, params, *, tb_cap=1024):
    """state: (B, input_dims), action: (B, n_agents*n_actions) -> q: (B, 1)."""
    B, S = state.shape
    A = action.shape[1]
    w1s, w1a, w2, w3, w4, wq_row, b_packed = params
    f1, f2, f3, f4 = w1s.shape[1], w2.shape[1], w3.shape[1], w4.shape[1]

    TB = _pick_tb(B, tb_cap)
    num_tiles = pl.cdiv(B, TB)
    grid = (num_tiles,)

    # Activations walk the batch axis; every parameter uses a constant
    # index_map so it is DMA'd to VMEM once and stays resident across steps.
    # (If profiling ever shows the input DMA exposed, add
    #  pipeline_mode=pl.Buffered(3) to the state/action specs.)
    in_specs = [
        pl.BlockSpec((TB, S), lambda i: (i, 0)),          # state tile
        pl.BlockSpec((TB, A), lambda i: (i, 0)),          # action tile
        pl.BlockSpec((S, f1), lambda i: (0, 0)),          # W1 (state rows)
        pl.BlockSpec((A, f1), lambda i: (0, 0)),          # W1 (action rows)
        pl.BlockSpec((f1, f2), lambda i: (0, 0)),         # W2
        pl.BlockSpec((f2, f3), lambda i: (0, 0)),         # W3
        pl.BlockSpec((f3, f4), lambda i: (0, 0)),         # W4
        pl.BlockSpec((1, f4), lambda i: (0, 0)),          # Wq as row vector
        pl.BlockSpec(b_packed.shape, lambda i: (0, 0)),   # packed biases
    ]
    # Lane-dense output: one (1, 1, TB) row per batch tile.
    out_specs = pl.BlockSpec((1, 1, TB), lambda i: (i, 0, 0))

    kernel = functools.partial(critic_kernel, dims=(f1, f2, f3, f4),
                               acc_cast=w1s.dtype)

    q_rows = pl.pallas_call(
        kernel,
        out_shape=jax.ShapeDtypeStruct((num_tiles, 1, TB), jnp.float32),
        grid=grid,
        in_specs=in_specs,
        out_specs=out_specs,
        compiler_params=pltpu.CompilerParams(
            dimension_semantics=("parallel",)),   # shards tiles across TCs on v7x
    )(state, action, w1s, w1a, w2, w3, w4, wq_row, b_packed)

    # Ragged last tile's garbage rows are discarded here (rows are independent).
    return q_rows.reshape(-1)[:B].reshape(B, 1)


def init_params(key, input_dims, n_agents, n_actions,
                fc1_dims, fc2_dims, fc3_dims, fc4_dims,
                *, lane_pad=128, weight_dtype=jnp.float32):
    """Deterministic synthetic init mirroring the module's parameter shapes.

    Weights are generated at the true dims (so init scales match the module),
    then zero-padded on hidden dims to a multiple of `lane_pad` for lane-dense
    vector work; zero padding is exactly neutral for the forward pass.

    Returns params pre-split / pre-packed / pre-cast for the kernel:
      w1s (S, F1p), w1a (A, F1p), w2 (F1p, F2p), w3 (F2p, F3p), w4 (F3p, F4p)
      in `weight_dtype`; wq_row (1, F4p) f32; b_packed (5, Dmax) f32.
    """
    S = input_dims
    A = n_agents * n_actions
    d_in = S + A
    dims = [(d_in, fc1_dims), (fc1_dims, fc2_dims), (fc2_dims, fc3_dims),
            (fc3_dims, fc4_dims), (fc4_dims, 1)]
    weights, biases = [], []
    keys = jax.random.split(key, 2 * len(dims))
    for i, (din, dout) in enumerate(dims):
        if i < 3:
            lim = 1.0 / jnp.sqrt(jnp.float32(dout))   # hidden_init: fan = size()[0]
        elif i == 3:
            lim = jnp.float32(0.003)
        else:
            lim = 1.0 / jnp.sqrt(jnp.float32(din))    # default nn.Linear scale
        w = jax.random.uniform(keys[2 * i], (din, dout), jnp.float32, -lim, lim)
        b = jax.random.uniform(keys[2 * i + 1], (dout,), jnp.float32, -lim, lim)
        weights.append(w)
        biases.append(b)

    w1, w2, w3, w4, wq = weights
    b1, b2, b3, b4, bq = biases

    # Lane-pad hidden dims (zero pad -> exactly neutral).
    f1p = _round_up(fc1_dims, lane_pad)
    f2p = _round_up(fc2_dims, lane_pad)
    f3p = _round_up(fc3_dims, lane_pad)
    f4p = _round_up(fc4_dims, lane_pad)

    def pad_to(w, rows, cols):
        return jnp.pad(w, ((0, rows - w.shape[0]), (0, cols - w.shape[1])))

    w1 = pad_to(w1, d_in, f1p)
    w2 = pad_to(w2, f1p, f2p)
    w3 = pad_to(w3, f2p, f3p)
    w4 = pad_to(w4, f3p, f4p)
    wq = pad_to(wq, f4p, 1)

    w1s, w1a = w1[:S, :], w1[S:, :]
    wq_row = wq.reshape(1, -1).astype(jnp.float32)    # (1, F4p), stays f32 (VPU)

    dmax = max(f1p, f2p, f3p, f4p, 1)
    b_packed = jnp.zeros((5, dmax), jnp.float32)
    for i, b in enumerate((b1, b2, b3, b4, bq)):
        b_packed = b_packed.at[i, :b.shape[0]].set(b)

    # One-time cast of MXU weights (bf16 path pays no per-step cast and half
    # the weight DMA bytes; biases / wq stay f32 for v5e-safe elementwise math).
    w1s = w1s.astype(weight_dtype)
    w1a = w1a.astype(weight_dtype)
    w2 = w2.astype(weight_dtype)
    w3 = w3.astype(weight_dtype)
    w4 = w4.astype(weight_dtype)

    return (w1s, w1a, w2, w3, w4, wq_row, b_packed)


def ref_forward(state, action, params):
    """Pure-JAX reference with identical semantics to the PyTorch module."""
    w1s, w1a, w2, w3, w4, wq_row, b_packed = params
    f1, f2, f3, f4 = w1s.shape[1], w2.shape[1], w3.shape[1], w4.shape[1]
    w1s = w1s.astype(jnp.float32)
    w1a = w1a.astype(jnp.float32)
    w2 = w2.astype(jnp.float32)
    w3 = w3.astype(jnp.float32)
    w4 = w4.astype(jnp.float32)
    b1 = b_packed[0, :f1]
    b2 = b_packed[1, :f2]
    b3 = b_packed[2, :f3]
    b4 = b_packed[3, :f4]
    bq = b_packed[4, :1]
    h = jnp.maximum(state @ w1s + action @ w1a + b1, 0.0)
    h = jnp.maximum(h @ w2 + b2, 0.0)
    h = jnp.maximum(h @ w3 + b3, 0.0)
    h = jnp.maximum(h @ w4 + b4, 0.0)
    return h @ wq_row.T + bq


if __name__ == "__main__":
    # Small shapes consistent with the module's forward signature.
    input_dims = 16
    n_agents = 2
    n_actions = 4
    fc1_dims = fc2_dims = fc3_dims = fc4_dims = 32

    key = jax.random.PRNGKey(0)
    k_state, k_action, k_params = jax.random.split(key, 3)

    params = init_params(k_params, input_dims, n_agents, n_actions,
                         fc1_dims, fc2_dims, fc3_dims, fc4_dims)

    ok = True
    # B=8 exercises the single-tile path; B=20 exercises the ragged last block
    # (no wrapper-side padding) plus the >=2-grid-step (dual-TC) path.
    for batch in (8, 20):
        ks = jax.random.fold_in(k_state, batch)
        ka = jax.random.fold_in(k_action, batch)
        state = jax.random.normal(ks, (batch, input_dims), jnp.float32)
        action = jax.random.normal(ka, (batch, n_agents * n_actions), jnp.float32)

        q = critic_forward(state, action, params)
        q = jax.block_until_ready(q)

        q_ref = ref_forward(state, action, params)
        ok = ok and (q.shape == (batch, 1))
        ok = ok and bool(jnp.allclose(q, q_ref, atol=5e-5, rtol=5e-5))

    assert ok
    print("KERNEL_OK")
</pallas_src>

<mosaic_0001>
module attributes {stable_mosaic.version = 11 : i64} {
  func.func @critic_kernel(%arg0: i32, %arg1: memref<8x16xf32, #tpu.memory_space<vmem>>, %arg2: memref<8x8xf32, #tpu.memory_space<vmem>>, %arg3: memref<16x128xf32, #tpu.memory_space<vmem>>, %arg4: memref<8x128xf32, #tpu.memory_space<vmem>>, %arg5: memref<128x128xf32, #tpu.memory_space<vmem>>, %arg6: memref<128x128xf32, #tpu.memory_space<vmem>>, %arg7: memref<128x128xf32, #tpu.memory_space<vmem>>, %arg8: memref<1x128xf32, #tpu.memory_space<vmem>>, %arg9: memref<5x128xf32, #tpu.memory_space<vmem>>, %arg10: memref<1x1x8xf32, #tpu.memory_space<vmem>>) attributes {dimension_semantics = [#tpu.dimension_semantics<parallel>], iteration_bounds = array<i64: 1>, scalar_prefetch = 0 : i64, scratch_operands = 0 : i64, tpu.core_type = #tpu.core_type<tc>, window_params = [{transform_indices = @transform_0, window_bounds = array<i64: 8, 16>}, {transform_indices = @transform_1, window_bounds = array<i64: 8, 8>}, {pipeline_mode = #tpu.pipeline_mode<synchronous>, transform_indices = @transform_2, window_bounds = array<i64: 16, 128>}, {pipeline_mode = #tpu.pipeline_mode<synchronous>, transform_indices = @transform_3, window_bounds = array<i64: 8, 128>}, {pipeline_mode = #tpu.pipeline_mode<synchronous>, transform_indices = @transform_4, window_bounds = array<i64: 128, 128>}, {pipeline_mode = #tpu.pipeline_mode<synchronous>, transform_indices = @transform_5, window_bounds = array<i64: 128, 128>}, {pipeline_mode = #tpu.pipeline_mode<synchronous>, transform_indices = @transform_6, window_bounds = array<i64: 128, 128>}, {pipeline_mode = #tpu.pipeline_mode<synchronous>, transform_indices = @transform_7, window_bounds = array<i64: 1, 128>}, {pipeline_mode = #tpu.pipeline_mode<synchronous>, transform_indices = @transform_8, window_bounds = array<i64: 5, 128>}, {transform_indices = @transform_9, window_bounds = array<i64: 1, 1, 8>}]} {
    %c0 = arith.constant 0 : index
    %c0_0 = arith.constant 0 : index
    %0 = vector.load %arg9[%c0, %c0_0] : memref<5x128xf32, #tpu.memory_space<vmem>>, vector<5x128xf32>
    %1 = vector.extract_strided_slice %0 {offsets = [0, 0], sizes = [1, 128], strides = [1, 1]} : vector<5x128xf32> to vector<1x128xf32>
    %2 = vector.extract_strided_slice %0 {offsets = [1, 0], sizes = [1, 128], strides = [1, 1]} : vector<5x128xf32> to vector<1x128xf32>
    %3 = vector.extract_strided_slice %0 {offsets = [2, 0], sizes = [1, 128], strides = [1, 1]} : vector<5x128xf32> to vector<1x128xf32>
    %4 = vector.extract_strided_slice %0 {offsets = [3, 0], sizes = [1, 128], strides = [1, 1]} : vector<5x128xf32> to vector<1x128xf32>
    %5 = vector.extract_strided_slice %0 {offsets = [4, 0], sizes = [1, 1], strides = [1, 1]} : vector<5x128xf32> to vector<1x1xf32>
    %c0_1 = arith.constant 0 : index
    %c0_2 = arith.constant 0 : index
    %6 = vector.load %arg1[%c0_1, %c0_2] : memref<8x16xf32, #tpu.memory_space<vmem>>, vector<8x16xf32>
    %c0_3 = arith.constant 0 : index
    %c0_4 = arith.constant 0 : index
    %7 = vector.load %arg2[%c0_3, %c0_4] : memref<8x8xf32, #tpu.memory_space<vmem>>, vector<8x8xf32>
    %c0_5 = arith.constant 0 : index
    %c0_6 = arith.constant 0 : index
    %8 = vector.load %arg3[%c0_5, %c0_6] : memref<16x128xf32, #tpu.memory_space<vmem>>, vector<16x128xf32>
    %cst = arith.constant dense<0.000000e+00> : vector<8x128xf32>
    %9 = tpu.matmul %6, %8, %cst {dimension_numbers = #tpu.dot_dimension_numbers<[1], [0], [0], [1], [0, 0, 1, 1], [], []>} : vector<8x16xf32>, vector<16x128xf32>, vector<8x128xf32> -> vector<8x128xf32>
    %c0_7 = arith.constant 0 : index
    %c0_8 = arith.constant 0 : index
    %10 = vector.load %arg4[%c0_7, %c0_8] : memref<8x128xf32, #tpu.memory_space<vmem>>, vector<8x128xf32>
    %cst_9 = arith.constant dense<0.000000e+00> : vector<8x128xf32>
    %11 = tpu.matmul %7, %10, %cst_9 {dimension_numbers = #tpu.dot_dimension_numbers<[1], [0], [0], [1], [0, 0, 1, 1], [], []>} : vector<8x8xf32>, vector<8x128xf32>, vector<8x128xf32> -> vector<8x128xf32>
    %12 = arith.addf %9, %11 : vector<8x128xf32>
    %13 = vector.broadcast %1 : vector<1x128xf32> to vector<8x128xf32>
    %14 = arith.addf %12, %13 : vector<8x128xf32>
    %cst_10 = arith.constant 0.000000e+00 : f32
    %15 = vector.broadcast %cst_10 : f32 to vector<8x128xf32>
    %16 = arith.maximumf %14, %15 : vector<8x128xf32>
    %c0_11 = arith.constant 0 : index
    %c0_12 = arith.constant 0 : index
    %17 = vector.load %arg5[%c0_11, %c0_12] : memref<128x128xf32, #tpu.memory_space<vmem>>, vector<128x128xf32>
    %cst_13 = arith.constant dense<0.000000e+00> : vector<8x128xf32>
    %18 = tpu.matmul %16, %17, %cst_13 {dimension_numbers = #tpu.dot_dimension_numbers<[1], [0], [0], [1], [0, 0, 1, 1], [], []>} : vector<8x128xf32>, vector<128x128xf32>, vector<8x128xf32> -> vector<8x128xf32>
    %19 = vector.broadcast %2 : vector<1x128xf32> to vector<8x128xf32>
    %20 = arith.addf %18, %19 : vector<8x128xf32>
    %cst_14 = arith.constant 0.000000e+00 : f32
    %21 = vector.broadcast %cst_14 : f32 to vector<8x128xf32>
    %22 = arith.maximumf %20, %21 : vector<8x128xf32>
    %c0_15 = arith.constant 0 : index
    %c0_16 = arith.constant 0 : index
    %23 = vector.load %arg6[%c0_15, %c0_16] : memref<128x128xf32, #tpu.memory_space<vmem>>, vector<128x128xf32>
    %cst_17 = arith.constant dense<0.000000e+00> : vector<8x128xf32>
    %24 = tpu.matmul %22, %23, %cst_17 {dimension_numbers = #tpu.dot_dimension_numbers<[1], [0], [0], [1], [0, 0, 1, 1], [], []>} : vector<8x128xf32>, vector<128x128xf32>, vector<8x128xf32> -> vector<8x128xf32>
    %25 = vector.broadcast %3 : vector<1x128xf32> to vector<8x128xf32>
    %26 = arith.addf %24, %25 : vector<8x128xf32>
    %cst_18 = arith.constant 0.000000e+00 : f32
    %27 = vector.broadcast %cst_18 : f32 to vector<8x128xf32>
    %28 = arith.maximumf %26, %27 : vector<8x128xf32>
    %c0_19 = arith.constant 0 : index
    %c0_20 = arith.constant 0 : index
    %29 = vector.load %arg7[%c0_19, %c0_20] : memref<128x128xf32, #tpu.memory_space<vmem>>, vector<128x128xf32>
    %cst_21 = arith.constant dense<0.000000e+00> : vector<8x128xf32>
    %30 = tpu.matmul %28, %29, %cst_21 {dimension_numbers = #tpu.dot_dimension_numbers<[1], [0], [0], [1], [0, 0, 1, 1], [], []>} : vector<8x128xf32>, vector<128x128xf32>, vector<8x128xf32> -> vector<8x128xf32>
    %31 = vector.broadcast %4 : vector<1x128xf32> to vector<8x128xf32>
    %32 = arith.addf %30, %31 : vector<8x128xf32>
    %cst_22 = arith.constant 0.000000e+00 : f32
    %33 = vector.broadcast %cst_22 : f32 to vector<8x128xf32>
    %34 = arith.maximumf %32, %33 : vector<8x128xf32>
    %c0_23 = arith.constant 0 : index
    %c0_24 = arith.constant 0 : index
    %35 = vector.load %arg8[%c0_23, %c0_24] : memref<1x128xf32, #tpu.memory_space<vmem>>, vector<1x128xf32>
    %36 = vector.broadcast %35 : vector<1x128xf32> to vector<8x128xf32>
    %37 = arith.mulf %34, %36 : vector<8x128xf32>
    %cst_25 = arith.constant dense<0.000000e+00> : vector<8xf32>
    %38 = vector.multi_reduction <add>, %37, %cst_25 [1] : vector<8x128xf32> to vector<8xf32>
    %39 = vector.shape_cast %38 : vector<8xf32> to vector<8x1xf32>
    %40 = vector.broadcast %5 : vector<1x1xf32> to vector<8x1xf32>
    %41 = arith.addf %39, %40 : vector<8x1xf32>
    %42 = vector.shape_cast %41 : vector<8x1xf32> to vector<1x1x8xf32>
    %c0_26 = arith.constant 0 : index
    %c0_27 = arith.constant 0 : index
    %c0_28 = arith.constant 0 : index
    %43 = vector.load %arg10[%c0_26, %c0_27, %c0_28] : memref<1x1x8xf32, #tpu.memory_space<vmem>>, vector<1x1x8xf32>
    tpu.vector_store %arg10[%c0_26, %c0_27, %c0_28], %42 {strides = array<i32>} : memref<1x1x8xf32, #tpu.memory_space<vmem>>, vector<1x1x8xf32>,
    return
  }
  func.func @transform_0(%arg0: i32) -> (i32, i32) {
    %c0_i32 = arith.constant 0 : i32
    %c0_i32_0 = arith.constant 0 : i32
    return %arg0, %c0_i32 : i32, i32
  }
  func.func @transform_1(%arg0: i32) -> (i32, i32) {
    %c0_i32 = arith.constant 0 : i32
    %c0_i32_0 = arith.constant 0 : i32
    return %arg0, %c0_i32 : i32, i32
  }
  func.func @transform_2(%arg0: i32) -> (i32, i32) {
    %c0_i32 = arith.constant 0 : i32
    %c0_i32_0 = arith.constant 0 : i32
    %c0_i32_1 = arith.constant 0 : i32
    return %c0_i32, %c0_i32_0 : i32, i32
  }
  func.func @transform_3(%arg0: i32) -> (i32, i32) {
    %c0_i32 = arith.constant 0 : i32
    %c0_i32_0 = arith.constant 0 : i32
    %c0_i32_1 = arith.constant 0 : i32
    return %c0_i32, %c0_i32_0 : i32, i32
  }
  func.func @transform_4(%arg0: i32) -> (i32, i32) {
    %c0_i32 = arith.constant 0 : i32
    %c0_i32_0 = arith.constant 0 : i32
    %c0_i32_1 = arith.constant 0 : i32
    return %c0_i32, %c0_i32_0 : i32, i32
  }
  func.func @transform_5(%arg0: i32) -> (i32, i32) {
    %c0_i32 = arith.constant 0 : i32
    %c0_i32_0 = arith.constant 0 : i32
    %c0_i32_1 = arith.constant 0 : i32
    return %c0_i32, %c0_i32_0 : i32, i32
  }
  func.func @transform_6(%arg0: i32) -> (i32, i32) {
    %c0_i32 = arith.constant 0 : i32
    %c0_i32_0 = arith.constant 0 : i32
    %c0_i32_1 = arith.constant 0 : i32
    return %c0_i32, %c0_i32_0 : i32, i32
  }
  func.func @transform_7(%arg0: i32) -> (i32, i32) {
    %c0_i32 = arith.constant 0 : i32
    %c0_i32_0 = arith.constant 0 : i32
    %c0_i32_1 = arith.constant 0 : i32
    return %c0_i32, %c0_i32_0 : i32, i32
  }
  func.func @transform_8(%arg0: i32) -> (i32, i32) {
    %c0_i32 = arith.constant 0 : i32
    %c0_i32_0 = arith.constant 0 : i32
    %c0_i32_1 = arith.constant 0 : i32
    return %c0_i32, %c0_i32_0 : i32, i32
  }
  func.func @transform_9(%arg0: i32) -> (i32, i32, i32) {
    %c0_i32 = arith.constant 0 : i32
    %c0_i32_0 = arith.constant 0 : i32
    %c0_i32_1 = arith.constant 0 : i32
    return %arg0, %c0_i32, %c0_i32_0 : i32, i32, i32
  }
}

</mosaic_0001>

<llo_original>
// kernel: tpu_custom_call.1
$region0: #{tpu_custom_call.1}
  #allocation0 [shape = 'u32[]', space=smem, size = 0x4, offset = 0x4, fixed_abs, tag = 'smem constant byte address 0x4 - core index']
  #allocation1 [shape = 'u32[144,128]{1,0:T(1,128)}', space=vmem, size = 0x12000, scoped, tag = 'internal scratch']
  %s0 = inlined_call_operand.hbm [shape: f32[8,16], index: 0, kind: input, shape index: {}]
  %s1 = inlined_call_operand.hbm [shape: f32[8,8], index: 1, kind: input, shape index: {}]
  %s2 = inlined_call_operand.hbm [shape: f32[16,128], index: 2, kind: input, shape index: {}]
  %s3 = inlined_call_operand.vmem [shape: f32[8,128], index: 3, kind: input, shape index: {}]
  %s4 = inlined_call_operand.hbm [shape: f32[128,128], index: 4, kind: input, shape index: {}]
  %s5 = inlined_call_operand.hbm [shape: f32[128,128], index: 5, kind: input, shape index: {}]
  %s6 = inlined_call_operand.hbm [shape: f32[128,128], index: 6, kind: input, shape index: {}]
  %s7 = inlined_call_operand.vmem [shape: f32[1,128], index: 7, kind: input, shape index: {}]
  %s8 = inlined_call_operand.vmem [shape: f32[5,128], index: 8, kind: input, shape index: {}]
  %s9 = inlined_call_operand.hbm [shape: f32[1,1,8], index: 9, kind: output, shape index: {}]
  %s10 = sld [smem:[#allocation0]]
  $region70: #{tpu_custom_call.1} parent=0
    _
  %s12 = ssub.s32 1, %s10
  %s13 = scalar_select 0, %s12, %s10
  $region1: #{tpu_custom_call.1} parent=0
    #allocation2 [shape = 'u8[4096]{0}', space=vmem, size = 0x1000, scoped, tag = 'input window, operand 0, single buffered']
    #allocation3 [shape = 's32[1]{0}', space=sflag, size = 0x4, scoped, tag = 'scoped memory for tpu_custom_call.1']
    #allocation4 [shape = 's32[1]{0}', space=sflag, size = 0x4, scoped, tag = 'scoped memory for tpu_custom_call.1']
    #allocation5 [shape = 'u8[4096]{0}', space=vmem, size = 0x1000, scoped, tag = 'input window, operand 1, single buffered']
    #allocation6 [shape = 's32[1]{0}', space=sflag, size = 0x4, scoped, tag = 'scoped memory for tpu_custom_call.1']
    #allocation7 [shape = 'u8[8192]{0}', space=vmem, size = 0x2000, scoped, tag = 'input window, operand 2, single buffered']
    #allocation8 [shape = 'u8[65536]{0}', space=vmem, size = 0x10000, scoped, tag = 'input window, operand 4, single buffered']
    #allocation9 [shape = 's32[1]{0}', space=sflag, size = 0x4, scoped, tag = 'scoped memory for tpu_custom_call.1']
    #allocation10 [shape = 'u8[65536]{0}', space=vmem, size = 0x10000, scoped, tag = 'input window, operand 5, single buffered']
    #allocation11 [shape = 'u8[65536]{0}', space=vmem, size = 0x10000, scoped, tag = 'input window, operand 6, single buffered']
    #allocation12 [shape = 's32[1]{0}', space=sflag, size = 0x4, scoped, tag = 'scoped memory for tpu_custom_call.1']
    #allocation13 [shape = 'u8[512]{0}', space=vmem, size = 0x400, scoped, tag = 'output window, operand 0, single buffered']
    %14 = vsyncpa [#allocation3], 0
    %15 = vsyncpa [#allocation6], 0
    %16 = vsyncpa [#allocation9], 0
    %17 = vsyncpa [#allocation12], 0
    %18 = vsyncpa [#allocation4], 0
    // Predicated region
    $region2: #{tpu_custom_call.1} parent=1 // pred_check
      _
    $region3: #{tpu_custom_call.1} parent=1 // pred_check_branch
      %20 = sbr.rel (0) target = $region5
    $region4: #{tpu_custom_call.1} parent=1 // pred_region
      %s22 = ssub.s32 128, 128
      %23 = vsyncadd [#allocation3], %s22
      %s25 = sshll.u32 [#allocation2], 4
      %s26 = int_to_ptr.vmem [resolvable:$true] %s25
      %28 = dma.hbm_to_vmem [thread:$0]  %s0, 128, %s26, [#allocation3]
    $region5: #{tpu_custom_call.1} parent=1 // pred_fallthru
      _
    // Predicated region
    $region6: #{tpu_custom_call.1} parent=1 // pred_check
      _
    $region7: #{tpu_custom_call.1} parent=1 // pred_check_branch
      %30 = sbr.rel (0) target = $region9
    $region8: #{tpu_custom_call.1} parent=1 // pred_region
      %s32 = ssub.s32 128, 128
      %33 = vsyncadd [#allocation6], %s32
      %s35 = sshll.u32 [#allocation5], 4
      %s36 = int_to_ptr.vmem [resolvable:$true] %s35
      %38 = dma.hbm_to_vmem [thread:$0]  %s1, 128, %s36, [#allocation6]
    $region9: #{tpu_custom_call.1} parent=1 // pred_fallthru
      _
    // Predicated region
    $region10: #{tpu_custom_call.1} parent=1 // pred_check
      _
    $region11: #{tpu_custom_call.1} parent=1 // pred_check_branch
      %40 = sbr.rel (0) target = $region13
    $region12: #{tpu_custom_call.1} parent=1 // pred_region
      %s42 = ssub.s32 256, 256
      %43 = vsyncadd [#allocation6], %s42
      %s44 = sshll.u32 [#allocation7], 4
      %s45 = int_to_ptr.vmem [resolvable:$true] %s44
      %50 = dma.hbm_to_vmem [thread:$0]  %s2, 256, %s45, [#allocation6], 128, 128, 8
    $region13: #{tpu_custom_call.1} parent=1 // pred_fallthru
      _
    // Predicated region
    $region14: #{tpu_custom_call.1} parent=1 // pred_check
      _
    $region15: #{tpu_custom_call.1} parent=1 // pred_check_branch
      %52 = sbr.rel (0) target = $region17
    $region16: #{tpu_custom_call.1} parent=1 // pred_region
      _
    $region17: #{tpu_custom_call.1} parent=1 // pred_fallthru
      _
    // Predicated region
    $region18: #{tpu_custom_call.1} parent=1 // pred_check
      _
    $region19: #{tpu_custom_call.1} parent=1 // pred_check_branch
      %54 = sbr.rel (0) target = $region21
    $region20: #{tpu_custom_call.1} parent=1 // pred_region
      %s56 = ssub.s32 2048, 2048
      %57 = vsyncadd [#allocation9], %s56
      %s58 = sshll.u32 [#allocation8], 4
      %s59 = int_to_ptr.vmem [resolvable:$true] %s58
      %64 = dma.hbm_to_vmem [thread:$0]  %s4, 2048, %s59, [#allocation9], 128, 128, 8
    $region21: #{tpu_custom_call.1} parent=1 // pred_fallthru
      _
    // Predicated region
    $region22: #{tpu_custom_call.1} parent=1 // pred_check
      _
    $region23: #{tpu_custom_call.1} parent=1 // pred_check_branch
      %66 = sbr.rel (0) target = $region25
    $region24: #{tpu_custom_call.1} parent=1 // pred_region
      %s68 = ssub.s32 2048, 2048
      %69 = vsyncadd [#allocation9], %s68
      %s70 = sshll.u32 [#allocation10], 4
      %s71 = int_to_ptr.vmem [resolvable:$true] %s70
      %76 = dma.hbm_to_vmem [thread:$0]  %s5, 2048, %s71, [#allocation9], 128, 128, 8
    $region25: #{tpu_custom_call.1} parent=1 // pred_fallthru
      _
    // Predicated region
    $region26: #{tpu_custom_call.1} parent=1 // pred_check
      _
    $region27: #{tpu_custom_call.1} parent=1 // pred_check_branch
      %78 = sbr.rel (0) target = $region29
    $region28: #{tpu_custom_call.1} parent=1 // pred_region
      %s80 = ssub.s32 2048, 2048
      %81 = vsyncadd [#allocation12], %s80
      %s82 = sshll.u32 [#allocation11], 4
      %s83 = int_to_ptr.vmem [resolvable:$true] %s82
      %88 = dma.hbm_to_vmem [thread:$0]  %s6, 2048, %s83, [#allocation12], 128, 128, 8
    $region29: #{tpu_custom_call.1} parent=1 // pred_fallthru
      _
    // Predicated region
    $region30: #{tpu_custom_call.1} parent=1 // pred_check
      _
    $region31: #{tpu_custom_call.1} parent=1 // pred_check_branch
      %90 = sbr.rel (0) target = $region33
    $region32: #{tpu_custom_call.1} parent=1 // pred_region
      _
    $region33: #{tpu_custom_call.1} parent=1 // pred_fallthru
      _
    // Predicated region
    $region34: #{tpu_custom_call.1} parent=1 // pred_check
      _
    $region35: #{tpu_custom_call.1} parent=1 // pred_check_branch
      %92 = sbr.rel (0) target = $region37
    $region36: #{tpu_custom_call.1} parent=1 // pred_region
      _
    $region37: #{tpu_custom_call.1} parent=1 // pred_fallthru
      _
    // Predicated region
    $region38: #{tpu_custom_call.1} parent=1 // pred_check
      _
    $region39: #{tpu_custom_call.1} parent=1 // pred_check_branch
      %94 = sbr.rel (0) target = $region41
    $region40: #{tpu_custom_call.1} parent=1 // pred_region
      %95 = dma.done [#allocation3], 128
    $region41: #{tpu_custom_call.1} parent=1 // pred_fallthru
      _
    // Predicated region
    $region42: #{tpu_custom_call.1} parent=1 // pred_check
      _
    $region43: #{tpu_custom_call.1} parent=1 // pred_check_branch
      %97 = sbr.rel (0) target = $region45
    $region44: #{tpu_custom_call.1} parent=1 // pred_region
      %98 = dma.done [#allocation6], 128
    $region45: #{tpu_custom_call.1} parent=1 // pred_fallthru
      _
    // Predicated region
    $region46: #{tpu_custom_call.1} parent=1 // pred_check
      _
    $region47: #{tpu_custom_call.1} parent=1 // pred_check_branch
      %100 = sbr.rel (0) target = $region49
    $region48: #{tpu_custom_call.1} parent=1 // pred_region
      %101 = dma.done [#allocation6], 256
    $region49: #{tpu_custom_call.1} parent=1 // pred_fallthru
      _
    // Predicated region
    $region50: #{tpu_custom_call.1} parent=1 // pred_check
      _
    $region51: #{tpu_custom_call.1} parent=1 // pred_check_branch
      %103 = sbr.rel (0) target = $region53
    $region52: #{tpu_custom_call.1} parent=1 // pred_region
      %104 = dma.done [#allocation9], 2048
    $region53: #{tpu_custom_call.1} parent=1 // pred_fallthru
      _
    // Predicated region
    $region54: #{tpu_custom_call.1} parent=1 // pred_check
      _
    $region55: #{tpu_custom_call.1} parent=1 // pred_check_branch
      %106 = sbr.rel (0) target = $region57
    $region56: #{tpu_custom_call.1} parent=1 // pred_region
      %107 = dma.done [#allocation9], 2048
    $region57: #{tpu_custom_call.1} parent=1 // pred_fallthru
      _
    // Predicated region
    $region58: #{tpu_custom_call.1} parent=1 // pred_check
      _
    $region59: #{tpu_custom_call.1} parent=1 // pred_check_branch
      %109 = sbr.rel (0) target = $region61
    $region60: #{tpu_custom_call.1} parent=1 // pred_region
      %110 = dma.done [#allocation12], 2048
    $region61: #{tpu_custom_call.1} parent=1 // pred_fallthru
      _
    %v111 = vld [vmem:[%s8] sm:$0x1f]
    %v112 = vld [vmem:[#allocation2] sm:$0xff]
    %v113 = vld [vmem:[#allocation5] sm:$0xff]
    %v114 = vld [vmem:[#allocation7] sm:$0xff]
    %v115 = vld [vmem:[#allocation7 + $0x8] sm:$0xff]
    %v116 = vld [vmem:[%s3] sm:$0xff]
    %vm117 = vcmask 64512
    %v119 = vsel %vm117, %v113, 0
    %121 = vmatprep.subr.mxu0 0.0
    %122 = vmatpush1.msra.mxu0 %v116
    %123 = vmatprep.subr.mxu0 0.0
    %124 = vmatpush1.msra.mxu0 0.0
    %125 = vmatprep.subr.mxu0 0.0
    %126 = vmatpush1.msra.mxu0 0.0
    %127 = vmatprep.subr.mxu0 0.0
    %128 = vmatpush1.msra.mxu0 0.0
    %129 = vmatprep.subr.mxu0 0.0
    %130 = vmatpush1.msra.mxu0 0.0
    %131 = vmatprep.subr.mxu0 0.0
    %132 = vmatpush1.msra.mxu0 0.0
    %133 = vmatprep.subr.mxu0 0.0
    %134 = vmatpush1.msra.mxu0 0.0
    %135 = vmatprep.subr.mxu0 0.0
    %136 = vmatpush1.msra.mxu0 0.0
    %137 = vmatprep.subr.mxu0 0.0
    %138 = vmatpush1.msra.mxu0 0.0
    %139 = vmatprep.subr.mxu0 0.0
    %140 = vmatpush1.msra.mxu0 0.0
    %141 = vmatprep.subr.mxu0 0.0
    %142 = vmatpush1.msra.mxu0 0.0
    %143 = vmatprep.subr.mxu0 0.0
    %144 = vmatpush1.msra.mxu0 0.0
    %145 = vmatprep.subr.mxu0 0.0
    %146 = vmatpush1.msra.mxu0 0.0
    %147 = vmatprep.subr.mxu0 0.0
    %148 = vmatpush1.msra.mxu0 0.0
    %149 = vmatprep.subr.mxu0 0.0
    %150 = vmatpush1.msra.mxu0 0.0
    %151 = vmatprep.subr.mxu0 0.0
    %152 = vmatpush1.msra.mxu0 0.0
    %153 = vmatprep.subr.mxu0 0.0
    %154 = vmatpush1.msra.mxu0 0.0
    %155 = vmatprep.subr.mxu0 0.0
    %156 = vmatpush1.msra.mxu0 0.0
    %157 = vmatprep.subr.mxu0 0.0
    %158 = vmatpush1.msra.mxu0 0.0
    %159 = vmatprep.subr.mxu0 0.0
    %160 = vmatpush1.msra.mxu0 0.0
    %161 = vmatprep.subr.mxu0 0.0
    %162 = vmatpush1.msra.mxu0 0.0
    %163 = vmatprep.subr.mxu0 0.0
    %164 = vmatpush1.msra.mxu0 0.0
    %165 = vmatprep.subr.mxu0 0.0
    %166 = vmatpush1.msra.mxu0 0.0
    %167 = vmatprep.subr.mxu0 0.0
    %168 = vmatpush1.msra.mxu0 0.0
    %169 = vmatprep.subr.mxu0 0.0
    %170 = vmatpush1.msra.mxu0 0.0
    %171 = vmatprep.subr.mxu0 0.0
    %172 = vmatpush1.msra.mxu0 0.0
    %173 = vmatprep.subr.mxu0 0.0
    %174 = vmatpush1.msra.mxu0 0.0
    %175 = vmatprep.subr.mxu0 0.0
    %176 = vmatpush1.msra.mxu0 0.0
    %177 = vmatprep.subr.mxu0 0.0
    %178 = vmatpush1.msra.mxu0 0.0
    %179 = vmatprep.subr.mxu0 0.0
    %180 = vmatpush1.msra.mxu0 0.0
    %181 = vmatprep.subr.mxu0 0.0
    %182 = vmatpush1.msra.mxu0 0.0
    %183 = vmatprep.subr.mxu0 0.0
    %184 = vmatpush1.msra.mxu0 0.0
    %185 = vmatprep.mubr.f32.mxu0 0.0
    %186 = vmatmul.mubr.f32.gmra.mrb[0].mxu0 %v119
    %v187 = vpop.f32.mrb[0].mxu0
    %v188 = vadd.f32 0.0, %v187
    %v189 = vpop.f32.mrb[0].mxu0
    %190 = vdwg.mxu0
    %vm191 = vcmask 130048
    %v193 = vsel %vm191, %v112, 0
    %195 = vmatprep.subr.mxu0 0.0
    %196 = vmatpush1.msra.mxu0 %v114
    %197 = vmatprep.subr.mxu0 0.0
    %198 = vmatpush1.msra.mxu0 %v115
    %199 = vmatprep.subr.mxu0 0.0
    %200 = vmatpush1.msra.mxu0 0.0
    %201 = vmatprep.subr.mxu0 0.0
    %202 = vmatpush1.msra.mxu0 0.0
    %203 = vmatprep.subr.mxu0 0.0
    %204 = vmatpush1.msra.mxu0 0.0
    %205 = vmatprep.subr.mxu0 0.0
    %206 = vmatpush1.msra.mxu0 0.0
    %207 = vmatprep.subr.mxu0 0.0
    %208 = vmatpush1.msra.mxu0 0.0
    %209 = vmatprep.subr.mxu0 0.0
    %210 = vmatpush1.msra.mxu0 0.0
    %211 = vmatprep.subr.mxu0 0.0
    %212 = vmatpush1.msra.mxu0 0.0
    %213 = vmatprep.subr.mxu0 0.0
    %214 = vmatpush1.msra.mxu0 0.0
    %215 = vmatprep.subr.mxu0 0.0
    %216 = vmatpush1.msra.mxu0 0.0
    %217 = vmatprep.subr.mxu0 0.0
    %218 = vmatpush1.msra.mxu0 0.0
    %219 = vmatprep.subr.mxu0 0.0
    %220 = vmatpush1.msra.mxu0 0.0
    %221 = vmatprep.subr.mxu0 0.0
    %222 = vmatpush1.msra.mxu0 0.0
    %223 = vmatprep.subr.mxu0 0.0
    %224 = vmatpush1.msra.mxu0 0.0
    %225 = vmatprep.subr.mxu0 0.0
    %226 = vmatpush1.msra.mxu0 0.0
    %227 = vmatprep.subr.mxu0 0.0
    %228 = vmatpush1.msra.mxu0 0.0
    %229 = vmatprep.subr.mxu0 0.0
    %230 = vmatpush1.msra.mxu0 0.0
    %231 = vmatprep.subr.mxu0 0.0
    %232 = vmatpush1.msra.mxu0 0.0
    %233 = vmatprep.subr.mxu0 0.0
    %234 = vmatpush1.msra.mxu0 0.0
    %235 = vmatprep.subr.mxu0 0.0
    %236 = vmatpush1.msra.mxu0 0.0
    %237 = vmatprep.subr.mxu0 0.0
    %238 = vmatpush1.msra.mxu0 0.0
    %239 = vmatprep.subr.mxu0 0.0
    %240 = vmatpush1.msra.mxu0 0.0
    %241 = vmatprep.subr.mxu0 0.0
    %242 = vmatpush1.msra.mxu0 0.0
    %243 = vmatprep.subr.mxu0 0.0
    %244 = vmatpush1.msra.mxu0 0.0
    %245 = vmatprep.subr.mxu0 0.0
    %246 = vmatpush1.msra.mxu0 0.0
    %247 = vmatprep.subr.mxu0 0.0
    %248 = vmatpush1.msra.mxu0 0.0
    %249 = vmatprep.subr.mxu0 0.0
    %250 = vmatpush1.msra.mxu0 0.0
    %251 = vmatprep.subr.mxu0 0.0
    %252 = vmatpush1.msra.mxu0 0.0
    %253 = vmatprep.subr.mxu0 0.0
    %254 = vmatpush1.msra.mxu0 0.0
    %255 = vmatprep.subr.mxu0 0.0
    %256 = vmatpush1.msra.mxu0 0.0
    %257 = vmatprep.subr.mxu0 0.0
    %258 = vmatpush1.msra.mxu0 0.0
    %259 = vmatprep.mubr.f32.mxu0 0.0
    %260 = vmatmul.mubr.f32.gmra.mrb[0].mxu0 %v193
    %v261 = vpop.f32.mrb[0].mxu0
    %v262 = vadd.f32 %v188, %v261
    %v263 = vpop.f32.mrb[0].mxu0
    %264 = vdwg.mxu0
    %v265 = vlaneseq
    %v266 = vshrl.u32 %v265, 7
    %v267 = vsub.s32 0, %v266
    %v268 = vrot.slane %v111, %v267
    %v269 = vadd.f32 %v262, %v268
    %v270 = vmax.f32 %v269, 0.0
    %v271 = vld [vmem:[#allocation8] sm:$0xff]
    %v272 = vld [vmem:[#allocation8 + $0x8] sm:$0xff]
    %v273 = vld [vmem:[#allocation8 + $0x10] sm:$0xff]
    %v274 = vld [vmem:[#allocation8 + $0x18] sm:$0xff]
    %v275 = vld [vmem:[#allocation8 + $0x20] sm:$0xff]
    %v276 = vld [vmem:[#allocation8 + $0x28] sm:$0xff]
    %v277 = vld [vmem:[#allocation8 + $0x30] sm:$0xff]
    %v278 = vld [vmem:[#allocation8 + $0x38] sm:$0xff]
    %v279 = vld [vmem:[#allocation8 + $0x40] sm:$0xff]
    %v280 = vld [vmem:[#allocation8 + $0x48] sm:$0xff]
    %v281 = vld [vmem:[#allocation8 + $0x50] sm:$0xff]
    %v282 = vld [vmem:[#allocation8 + $0x58] sm:$0xff]
    %v283 = vld [vmem:[#allocation8 + $0x60] sm:$0xff]
    %v284 = vld [vmem:[#allocation8 + $0x68] sm:$0xff]
    %v285 = vld [vmem:[#allocation8 + $0x70] sm:$0xff]
    %v286 = vld [vmem:[#allocation8 + $0x78] sm:$0xff]
    %v287 = vlaneseq
    %v288 = vshrl.u32 %v287, 7
    %v289 = vsub.s32 1, %v288
    %v290 = vrot.slane %v111, %v289
    %291 = vmatprep.subr.mxu0 0.0
    %292 = vmatpush1.msra.mxu0 %v271
    %293 = vmatprep.subr.mxu0 0.0
    %294 = vmatpush1.msra.mxu0 %v272
    %295 = vmatprep.subr.mxu0 0.0
    %296 = vmatpush1.msra.mxu0 %v273
    %297 = vmatprep.subr.mxu0 0.0
    %298 = vmatpush1.msra.mxu0 %v274
    %299 = vmatprep.subr.mxu0 0.0
    %300 = vmatpush1.msra.mxu0 %v275
    %301 = vmatprep.subr.mxu0 0.0
    %302 = vmatpush1.msra.mxu0 %v276
    %303 = vmatprep.subr.mxu0 0.0
    %304 = vmatpush1.msra.mxu0 %v277
    %305 = vmatprep.subr.mxu0 0.0
    %306 = vmatpush1.msra.mxu0 %v278
    %307 = vmatprep.subr.mxu0 0.0
    %308 = vmatpush1.msra.mxu0 %v279
    %309 = vmatprep.subr.mxu0 0.0
    %310 = vmatpush1.msra.mxu0 %v280
    %311 = vmatprep.subr.mxu0 0.0
    %312 = vmatpush1.msra.mxu0 %v281
    %313 = vmatprep.subr.mxu0 0.0
    %314 = vmatpush1.msra.mxu0 %v282
    %315 = vmatprep.subr.mxu0 0.0
    %316 = vmatpush1.msra.mxu0 %v283
    %317 = vmatprep.subr.mxu0 0.0
    %318 = vmatpush1.msra.mxu0 %v284
    %319 = vmatprep.subr.mxu0 0.0
    %320 = vmatpush1.msra.mxu0 %v285
    %321 = vmatprep.subr.mxu0 0.0
    %322 = vmatpush1.msra.mxu0 %v286
    %323 = vmatprep.subr.mxu0 0.0
    %324 = vmatpush1.msra.mxu0 0.0
    %325 = vmatprep.subr.mxu0 0.0
    %326 = vmatpush1.msra.mxu0 0.0
    %327 = vmatprep.subr.mxu0 0.0
    %328 = vmatpush1.msra.mxu0 0.0
    %329 = vmatprep.subr.mxu0 0.0
    %330 = vmatpush1.msra.mxu0 0.0
    %331 = vmatprep.subr.mxu0 0.0
    %332 = vmatpush1.msra.mxu0 0.0
    %333 = vmatprep.subr.mxu0 0.0
    %334 = vmatpush1.msra.mxu0 0.0
    %335 = vmatprep.subr.mxu0 0.0
    %336 = vmatpush1.msra.mxu0 0.0
    %337 = vmatprep.subr.mxu0 0.0
    %338 = vmatpush1.msra.mxu0 0.0
    %339 = vmatprep.subr.mxu0 0.0
    %340 = vmatpush1.msra.mxu0 0.0
    %341 = vmatprep.subr.mxu0 0.0
    %342 = vmatpush1.msra.mxu0 0.0
    %343 = vmatprep.subr.mxu0 0.0
    %344 = vmatpush1.msra.mxu0 0.0
    %345 = vmatprep.subr.mxu0 0.0
    %346 = vmatpush1.msra.mxu0 0.0
    %347 = vmatprep.subr.mxu0 0.0
    %348 = vmatpush1.msra.mxu0 0.0
    %349 = vmatprep.subr.mxu0 0.0
    %350 = vmatpush1.msra.mxu0 0.0
    %351 = vmatprep.subr.mxu0 0.0
    %352 = vmatpush1.msra.mxu0 0.0
    %353 = vmatprep.subr.mxu0 0.0
    %354 = vmatpush1.msra.mxu0 0.0
    %355 = vmatprep.mubr.f32.mxu0 0.0
    %356 = vmatmul.mubr.f32.gmra.mrb[0].mxu0 %v270
    %v357 = vpop.f32.mrb[0].mxu0
    %v358 = vadd.f32 %v290, %v357
    %v359 = vpop.f32.mrb[0].mxu0
    %360 = vdwg.mxu0
    %v361 = vmax.f32 %v358, 0.0
    %v362 = vld [vmem:[#allocation10] sm:$0xff]
    %v363 = vld [vmem:[#allocation10 + $0x8] sm:$0xff]
    %v364 = vld [vmem:[#allocation10 + $0x10] sm:$0xff]
    %v365 = vld [vmem:[#allocation10 + $0x18] sm:$0xff]
    %v366 = vld [vmem:[#allocation10 + $0x20] sm:$0xff]
    %v367 = vld [vmem:[#allocation10 + $0x28] sm:$0xff]
    %v368 = vld [vmem:[#allocation10 + $0x30] sm:$0xff]
    %v369 = vld [vmem:[#allocation10 + $0x38] sm:$0xff]
    %v370 = vld [vmem:[#allocation10 + $0x40] sm:$0xff]
    %v371 = vld [vmem:[#allocation10 + $0x48] sm:$0xff]
    %v372 = vld [vmem:[#allocation10 + $0x50] sm:$0xff]
    %v373 = vld [vmem:[#allocation10 + $0x58] sm:$0xff]
    %v374 = vld [vmem:[#allocation10 + $0x60] sm:$0xff]
    %v375 = vld [vmem:[#allocation10 + $0x68] sm:$0xff]
    %v376 = vld [vmem:[#allocation10 + $0x70] sm:$0xff]
    %v377 = vld [vmem:[#allocation10 + $0x78] sm:$0xff]
    %v378 = vlaneseq
    %v379 = vshrl.u32 %v378, 7
    %v380 = vsub.s32 2, %v379
    %v381 = vrot.slane %v111, %v380
    %382 = vmatprep.subr.mxu0 0.0
    %383 = vmatpush1.msra.mxu0 %v362
    %384 = vmatprep.subr.mxu0 0.0
    %385 = vmatpush1.msra.mxu0 %v363
    %386 = vmatprep.subr.mxu0 0.0
    %387 = vmatpush1.msra.mxu0 %v364
    %388 = vmatprep.subr.mxu0 0.0
    %389 = vmatpush1.msra.mxu0 %v365
    %390 = vmatprep.subr.mxu0 0.0
    %391 = vmatpush1.msra.mxu0 %v366
    %392 = vmatprep.subr.mxu0 0.0
    %393 = vmatpush1.msra.mxu0 %v367
    %394 = vmatprep.subr.mxu0 0.0
    %395 = vmatpush1.msra.mxu0 %v368
    %396 = vmatprep.subr.mxu0 0.0
    %397 = vmatpush1.msra.mxu0 %v369
    %398 = vmatprep.subr.mxu0 0.0
    %399 = vmatpush1.msra.mxu0 %v370
    %400 = vmatprep.subr.mxu0 0.0
    %401 = vmatpush1.msra.mxu0 %v371
    %402 = vmatprep.subr.mxu0 0.0
    %403 = vmatpush1.msra.mxu0 %v372
    %404 = vmatprep.subr.mxu0 0.0
    %405 = vmatpush1.msra.mxu0 %v373
    %406 = vmatprep.subr.mxu0 0.0
    %407 = vmatpush1.msra.mxu0 %v374
    %408 = vmatprep.subr.mxu0 0.0
    %409 = vmatpush1.msra.mxu0 %v375
    %410 = vmatprep.subr.mxu0 0.0
    %411 = vmatpush1.msra.mxu0 %v376
    %412 = vmatprep.subr.mxu0 0.0
    %413 = vmatpush1.msra.mxu0 %v377
    %414 = vmatprep.subr.mxu0 0.0
    %415 = vmatpush1.msra.mxu0 0.0
    %416 = vmatprep.subr.mxu0 0.0
    %417 = vmatpush1.msra.mxu0 0.0
    %418 = vmatprep.subr.mxu0 0.0
    %419 = vmatpush1.msra.mxu0 0.0
    %420 = vmatprep.subr.mxu0 0.0
    %421 = vmatpush1.msra.mxu0 0.0
    %422 = vmatprep.subr.mxu0 0.0
    %423 = vmatpush1.msra.mxu0 0.0
    %424 = vmatprep.subr.mxu0 0.0
    %425 = vmatpush1.msra.mxu0 0.0
    %426 = vmatprep.subr.mxu0 0.0
    %427 = vmatpush1.msra.mxu0 0.0
    %428 = vmatprep.subr.mxu0 0.0
    %429 = vmatpush1.msra.mxu0 0.0
    %430 = vmatprep.subr.mxu0 0.0
    %431 = vmatpush1.msra.mxu0 0.0
    %432 = vmatprep.subr.mxu0 0.0
    %433 = vmatpush1.msra.mxu0 0.0
    %434 = vmatprep.subr.mxu0 0.0
    %435 = vmatpush1.msra.mxu0 0.0
    %436 = vmatprep.subr.mxu0 0.0
    %437 = vmatpush1.msra.mxu0 0.0
    %438 = vmatprep.subr.mxu0 0.0
    %439 = vmatpush1.msra.mxu0 0.0
    %440 = vmatprep.subr.mxu0 0.0
    %441 = vmatpush1.msra.mxu0 0.0
    %442 = vmatprep.subr.mxu0 0.0
    %443 = vmatpush1.msra.mxu0 0.0
    %444 = vmatprep.subr.mxu0 0.0
    %445 = vmatpush1.msra.mxu0 0.0
    %446 = vmatprep.mubr.f32.mxu0 0.0
    %447 = vmatmul.mubr.f32.gmra.mrb[0].mxu0 %v361
    %v448 = vpop.f32.mrb[0].mxu0
    %v449 = vadd.f32 %v381, %v448
    %v450 = vpop.f32.mrb[0].mxu0
    %451 = vdwg.mxu0
    %v452 = vmax.f32 %v449, 0.0
    %v453 = vld [vmem:[#allocation11] sm:$0xff]
    %v454 = vld [vmem:[#allocation11 + $0x8] sm:$0xff]
    %v455 = vld [vmem:[#allocation11 + $0x10] sm:$0xff]
    %v456 = vld [vmem:[#allocation11 + $0x18] sm:$0xff]
    %v457 = vld [vmem:[#allocation11 + $0x20] sm:$0xff]
    %v458 = vld [vmem:[#allocation11 + $0x28] sm:$0xff]
    %v459 = vld [vmem:[#allocation11 + $0x30] sm:$0xff]
    %v460 = vld [vmem:[#allocation11 + $0x38] sm:$0xff]
    %v461 = vld [vmem:[#allocation11 + $0x40] sm:$0xff]
    %v462 = vld [vmem:[#allocation11 + $0x48] sm:$0xff]
    %v463 = vld [vmem:[#allocation11 + $0x50] sm:$0xff]
    %v464 = vld [vmem:[#allocation11 + $0x58] sm:$0xff]
    %v465 = vld [vmem:[#allocation11 + $0x60] sm:$0xff]
    %v466 = vld [vmem:[#allocation11 + $0x68] sm:$0xff]
    %v467 = vld [vmem:[#allocation11 + $0x70] sm:$0xff]
    %v468 = vld [vmem:[#allocation11 + $0x78] sm:$0xff]
    %v469 = vlaneseq
    %v470 = vshrl.u32 %v469, 7
    %v471 = vsub.s32 3, %v470
    %v472 = vrot.slane %v111, %v471
    %473 = vmatprep.subr.mxu0 0.0
    %474 = vmatpush1.msra.mxu0 %v453
    %475 = vmatprep.subr.mxu0 0.0
    %476 = vmatpush1.msra.mxu0 %v454
    %477 = vmatprep.subr.mxu0 0.0
    %478 = vmatpush1.msra.mxu0 %v455
    %479 = vmatprep.subr.mxu0 0.0
    %480 = vmatpush1.msra.mxu0 %v456
    %481 = vmatprep.subr.mxu0 0.0
    %482 = vmatpush1.msra.mxu0 %v457
    %483 = vmatprep.subr.mxu0 0.0
    %484 = vmatpush1.msra.mxu0 %v458
    %485 = vmatprep.subr.mxu0 0.0
    %486 = vmatpush1.msra.mxu0 %v459
    %487 = vmatprep.subr.mxu0 0.0
    %488 = vmatpush1.msra.mxu0 %v460
    %489 = vmatprep.subr.mxu0 0.0
    %490 = vmatpush1.msra.mxu0 %v461
    %491 = vmatprep.subr.mxu0 0.0
    %492 = vmatpush1.msra.mxu0 %v462
    %493 = vmatprep.subr.mxu0 0.0
    %494 = vmatpush1.msra.mxu0 %v463
    %495 = vmatprep.subr.mxu0 0.0
    %496 = vmatpush1.msra.mxu0 %v464
    %497 = vmatprep.subr.mxu0 0.0
    %498 = vmatpush1.msra.mxu0 %v465
    %499 = vmatprep.subr.mxu0 0.0
    %500 = vmatpush1.msra.mxu0 %v466
    %501 = vmatprep.subr.mxu0 0.0
    %502 = vmatpush1.msra.mxu0 %v467
    %503 = vmatprep.subr.mxu0 0.0
    %504 = vmatpush1.msra.mxu0 %v468
    %505 = vmatprep.subr.mxu0 0.0
    %506 = vmatpush1.msra.mxu0 0.0
    %507 = vmatprep.subr.mxu0 0.0
    %508 = vmatpush1.msra.mxu0 0.0
    %509 = vmatprep.subr.mxu0 0.0
    %510 = vmatpush1.msra.mxu0 0.0
    %511 = vmatprep.subr.mxu0 0.0
    %512 = vmatpush1.msra.mxu0 0.0
    %513 = vmatprep.subr.mxu0 0.0
    %514 = vmatpush1.msra.mxu0 0.0
    %515 = vmatprep.subr.mxu0 0.0
    %516 = vmatpush1.msra.mxu0 0.0
    %517 = vmatprep.subr.mxu0 0.0
    %518 = vmatpush1.msra.mxu0 0.0
    %519 = vmatprep.subr.mxu0 0.0
    %520 = vmatpush1.msra.mxu0 0.0
    %521 = vmatprep.subr.mxu0 0.0
    %522 = vmatpush1.msra.mxu0 0.0
    %523 = vmatprep.subr.mxu0 0.0
    %524 = vmatpush1.msra.mxu0 0.0
    %525 = vmatprep.subr.mxu0 0.0
    %526 = vmatpush1.msra.mxu0 0.0
    %527 = vmatprep.subr.mxu0 0.0
    %528 = vmatpush1.msra.mxu0 0.0
    %529 = vmatprep.subr.mxu0 0.0
    %530 = vmatpush1.msra.mxu0 0.0
    %531 = vmatprep.subr.mxu0 0.0
    %532 = vmatpush1.msra.mxu0 0.0
    %533 = vmatprep.subr.mxu0 0.0
    %534 = vmatpush1.msra.mxu0 0.0
    %535 = vmatprep.subr.mxu0 0.0
    %536 = vmatpush1.msra.mxu0 0.0
    %537 = vmatprep.mubr.f32.mxu0 0.0
    %538 = vmatmul.mubr.f32.gmra.mrb[0].mxu0 %v452
    %v539 = vpop.f32.mrb[0].mxu0
    %v540 = vadd.f32 %v472, %v539
    %v541 = vpop.f32.mrb[0].mxu0
    %542 = vdwg.mxu0
    %v543 = vmax.f32 %v540, 0.0
    %v544 = vld [vmem:[%s7] sm:$0x1]
    %v546 = vlaneseq
    %v547 = vshrl.u32 %v546, 7
    %v548 = vsub.s32 0, %v547
    %v549 = vrot.slane %v544, %v548
    %v551 = vmul.f32 %v543, %v549
    %552 = vadd.xlane.f32.xlu0 %v551
    %v553 = vpop.xlane.xlu0 %552
    %v554 = vlaneseq
    %v555 = vshrl.u32 %v554, 7
    %v556 = vsub.s32 4, %v555
    %v557 = vrot.slane %v111, %v556
    %v558 = vadd.f32 %v553, %v557
    %560 = vset.pattern.permute.xlu0 0
    %561 = vperm.xlu0 %560, %v558
    %v562 = vpop.permute.xlu0 %561
    %v563 = vlaneseq
    %v564 = vand.u32 %v563, 127
    %v565 = vlaneseq
    %v566 = vshrl.u32 %v565, 7
    %v567 = vsub.s32 %v564, %v566
    %v568 = vrot.slane %v562, %v567
    %vm570 = vcmask 57344
    %571 = vst.msk [vmem:[#allocation13] sm:$0x1] %vm570, %v568
    // Predicated region
    $region62: #{tpu_custom_call.1} parent=1 // pred_check
      _
    $region63: #{tpu_custom_call.1} parent=1 // pred_check_branch
      %573 = sbr.rel (0) target = $region65
    $region64: #{tpu_custom_call.1} parent=1 // pred_region
      %s575 = ssub.s32 16, 16
      %576 = vsyncadd [#allocation4], %s575
      %s578 = sshll.u32 [#allocation13], 4
      %s579 = int_to_ptr.vmem [resolvable:$true] %s578
      %581 = dma.vmem_to_hbm [thread:$0]  %s579, 16, %s9, [#allocation4]
    $region65: #{tpu_custom_call.1} parent=1 // pred_fallthru
      _
    // Predicated region
    $region66: #{tpu_custom_call.1} parent=1 // pred_check
      _
    $region67: #{tpu_custom_call.1} parent=1 // pred_check_branch
      %583 = sbr.rel (0) target = $region69
    $region68: #{tpu_custom_call.1} parent=1 // pred_region
      %584 = dma.done [#allocation4], 16
    $region69: #{tpu_custom_call.1} parent=1 // pred_fallthru
      _
    %585 = vsyncpa [#allocation3], 1
    %586 = vsyncpa [#allocation6], 1
    %587 = vsyncpa [#allocation9], 1
    %588 = vsyncpa [#allocation12], 1
    %589 = vsyncpa [#allocation4], 1

</llo_original>
